<compile_context>
chip_gen: v7x
topology: tpu7x:2x2x1
jax: 0.10.0
libtpu: 0.0.40
codegen_flags: <defaults>
</compile_context>

<pallas_src>
import functools

import jax
import jax.numpy as jnp
from jax.experimental import pallas as pl
from jax.experimental.pallas import tpu as pltpu

_EPS = 1e-5          # F.normalize eps
_NEG_BIG = -1e30     # "minus infinity" fill that stays NaN-free in the online LSE


def _round_up(a, b):
    return (a + b - 1) // b * b


def _vmem_limit_bytes():
    """Generation-aware VMEM request: ~7/8 of physical, capped at 112 MiB."""
    cap = 64 * 1024 * 1024  # conservative fallback == v7x per-TC VMEM
    try:
        info = pltpu.get_tpu_info()
        cap = int(getattr(info, "vmem_capacity_bytes", cap) or cap)
    except Exception:
        pass
    return int(min(cap - cap // 8, 112 * 1024 * 1024))


def _select_tiles(B, C, D, vmem_limit, b_tile_req=None, c_tile_req=None):
    """Pick lane-aligned tiles that fit the (double-buffered) VMEM budget."""
    d_pad = _round_up(D, 128)
    c_full = _round_up(C, 128)

    if c_tile_req is None:
        # Largest 256-aligned C tile whose double-buffered (c_tile, d_pad) f32
        # weight stream fits in ~half the VMEM budget; capped at 2048.
        w_budget = vmem_limit // 2
        c_cap = (w_budget // (2 * d_pad * 4)) // 256 * 256
        c_tile = int(max(256, min(2048, max(c_cap, 128))))
    else:
        c_tile = max(128, _round_up(int(c_tile_req), 128))
    if c_tile >= c_full:
        c_tile = c_full                      # one C tile covers all classes
    c_pad = _round_up(C, c_tile)

    b8 = _round_up(max(B, 8), 8)
    b_tile = 256 if b_tile_req is None else max(8, _round_up(int(b_tile_req), 8))
    b_tile = min(b_tile, b8)
    if b8 >= 16:
        # Keep >=2 batch tiles so the "parallel" axis spans both TensorCores
        # on v7x (and feeds megacore on v6e) instead of idling one core.
        half = _round_up((b8 + 1) // 2, 8)
        b_tile = min(b_tile, half)
    b_pad = _round_up(b8, b_tile)
    return b_tile, b_pad, c_tile, c_pad, d_pad


# ---------------------------------------------------------------------------
# Kernel A: cos tile (MXU) + online logsumexp over negative classes.
# Outputs only the per-sample LSE (no cos writeback to HBM).
# ---------------------------------------------------------------------------
def _neg_lse_kernel(x_ref, w_ref, lab_ref, nlse_ref,
                    xn_ref, m_ref, l_ref, *, s, c_actual, c_tile):
    c = pl.program_id(1)
    nc = pl.num_programs(1)

    @pl.when(c == 0)
    def _init():
        # x / max(||x||, eps) == x * rsqrt(max(||x||^2, eps^2)) (EUP rsqrt),
        # computed once per B tile and cached in scratch across all C tiles.
        x = x_ref[...]
        ss = jnp.sum(x * x, axis=-1, keepdims=True)
        xn_ref[...] = x * jax.lax.rsqrt(jnp.maximum(ss, _EPS * _EPS))
        m_ref[...] = jnp.full_like(m_ref, _NEG_BIG)
        l_ref[...] = jnp.zeros_like(l_ref)

    # Normalize the streamed weight tile in-kernel (VPU/EUP filler hidden
    # under the memory-bound W DMA; all-zero padded rows stay exactly zero).
    w = w_ref[...]
    wn = w * jax.lax.rsqrt(
        jnp.maximum(jnp.sum(w * w, axis=-1, keepdims=True), _EPS * _EPS))

    # Cosine block: contract over D directly (no transpose of the weight tile).
    cos = jax.lax.dot_general(
        xn_ref[...], wn,
        dimension_numbers=(((1,), (1,)), ((), ())),
        preferred_element_type=jnp.float32)                      # (bt, ct)

    lab = lab_ref[...]                                           # (bt, 1) int32
    cls = jax.lax.broadcasted_iota(jnp.int32, cos.shape, 1) + c * c_tile
    # Negatives = valid (non-padded) classes that are not the row's target.
    is_neg = jnp.logical_and(cls < c_actual, cls != lab)

    # Online logsumexp of s*cos over negative classes.  Masked lanes carry
    # _NEG_BIG so exp(z - m_new) underflows to exactly 0 -- no post-exp select
    # needed (assumes C >= 2, i.e. every row has >=1 negative in tile 0).
    z = jnp.where(is_neg, s * cos, _NEG_BIG)
    m_old = m_ref[...]
    m_new = jnp.maximum(m_old, jnp.max(z, axis=-1, keepdims=True))
    l_ref[...] = (jnp.exp(m_old - m_new) * l_ref[...]
                  + jnp.sum(jnp.exp(z - m_new), axis=-1, keepdims=True))
    m_ref[...] = m_new

    @pl.when(c == nc - 1)
    def _finalize():
        nlse_ref[...] = m_ref[...] + jnp.log(l_ref[...])


# ---------------------------------------------------------------------------
# Kernel B: recomputed cos tile (MXU) fused with the BCE loss + per-sample
# row-sum accumulation over C.  The positive-class branch is handled once per
# row (masked lane-reduces of target cos / bias, finalized with one log1p).
# ---------------------------------------------------------------------------
def _bce_loss_kernel(x_ref, w_ref, lab_ref, bias_ref, loss_ref,
                     xn_ref, acc_ref, tcos_ref, tbias_ref,
                     *, s, m, c_actual, c_tile):
    c = pl.program_id(1)
    nc = pl.num_programs(1)

    @pl.when(c == 0)
    def _init():
        x = x_ref[...]
        ss = jnp.sum(x * x, axis=-1, keepdims=True)
        xn_ref[...] = x * jax.lax.rsqrt(jnp.maximum(ss, _EPS * _EPS))
        acc_ref[...] = jnp.zeros_like(acc_ref)
        tcos_ref[...] = jnp.zeros_like(tcos_ref)
        tbias_ref[...] = jnp.zeros_like(tbias_ref)

    w = w_ref[...]
    wn = w * jax.lax.rsqrt(
        jnp.maximum(jnp.sum(w * w, axis=-1, keepdims=True), _EPS * _EPS))
    cos = jax.lax.dot_general(
        xn_ref[...], wn,
        dimension_numbers=(((1,), (1,)), ((), ())),
        preferred_element_type=jnp.float32)                      # (bt, ct)

    bias = bias_ref[...]                  # (1, ct)
    lab = lab_ref[...]                    # (bt, 1)
    cls = jax.lax.broadcasted_iota(jnp.int32, cos.shape, 1) + c * c_tile
    is_tgt = cls == lab                   # labels are always < C (never padded)
    is_neg = jnp.logical_and(cls < c_actual, jnp.logical_not(is_tgt))

    # Negative-class loss: only 2 transcendentals / element.  The clamp to
    # [-s, s] keeps exp() finite for s=64, matching the torch formula.
    zn = jnp.clip(s * cos - bias, -s, s)
    n_loss = jnp.log1p(jnp.exp(zn))
    acc_ref[...] += jnp.sum(jnp.where(is_neg, n_loss, 0.0),
                            axis=-1, keepdims=True)

    # Extract the target column's cos / bias for this tile via masked reduces
    # (each row's target lands in exactly one C tile; the rest contribute 0).
    tcos_ref[...] += jnp.sum(jnp.where(is_tgt, cos, 0.0),
                             axis=-1, keepdims=True)
    tbias_ref[...] += jnp.sum(jnp.where(is_tgt, bias, 0.0),
                              axis=-1, keepdims=True)

    @pl.when(c == nc - 1)
    def _finalize():
        zp = jnp.clip(s * (tcos_ref[...] - m) - tbias_ref[...], -s, s)
        loss_ref[...] = acc_ref[...] + jnp.log1p(jnp.exp(-zp))


# ---------------------------------------------------------------------------
# Wrapper: padding (only when needed), tiling, bias update, reductions.
# ---------------------------------------------------------------------------
def sample_to_sample_bce_loss(x, feat_mem, label, bias, *, m=0.1, s=64.0,
                              b_tile=None, c_tile=None):
    B, D = x.shape
    C, D2 = feat_mem.shape
    assert D == D2
    # The streamlined online-LSE (no post-exp select) needs >=1 negative class
    # per row in the first C tile, i.e. C >= 2.
    assert C >= 2, "Sample_to_Sample_Based_BCE_Loss needs out_features >= 2"

    f32 = jnp.float32
    vmem_limit = _vmem_limit_bytes()
    b_tile, b_pad, c_tile, c_pad, d_pad = _select_tiles(
        B, C, D, vmem_limit, b_tile_req=b_tile, c_tile_req=c_tile)
    nb, nc = b_pad // b_tile, c_pad // c_tile

    # ---- pad inputs only when shapes are not already aligned ---------------
    xp = x.astype(f32)
    if (B, D) != (b_pad, d_pad):
        xp = jnp.zeros((b_pad, d_pad), f32).at[:B, :D].set(xp)
    wp = feat_mem.astype(f32)
    if (C, D) != (c_pad, d_pad):
        wp = jnp.zeros((c_pad, d_pad), f32).at[:C, :D].set(wp)
    labp = label.astype(jnp.int32).reshape(B, 1)
    if B != b_pad:
        labp = jnp.zeros((b_pad, 1), jnp.int32).at[:B].set(labp)

    cparams = pltpu.CompilerParams(
        dimension_semantics=("parallel", "arbitrary"),
        vmem_limit_bytes=vmem_limit)

    # ---- pass 1: per-sample LSE over negative classes (no cos writeback) ---
    neg_lse = pl.pallas_call(
        functools.partial(_neg_lse_kernel, s=float(s),
                          c_actual=C, c_tile=c_tile),
        grid=(nb, nc),
        in_specs=[
            pl.BlockSpec((b_tile, d_pad), lambda b, c: (b, 0)),   # x
            pl.BlockSpec((c_tile, d_pad), lambda b, c: (c, 0)),   # feat_mem (streamed)
            pl.BlockSpec((b_tile, 1), lambda b, c: (b, 0)),       # labels
        ],
        out_specs=pl.BlockSpec((b_tile, 1), lambda b, c: (b, 0)), # neg LSE
        out_shape=jax.ShapeDtypeStruct((b_pad, 1), f32),
        scratch_shapes=[
            pltpu.VMEM((b_tile, d_pad), f32),   # cached normalized x
            pltpu.VMEM((b_tile, 1), f32),       # running max
            pltpu.VMEM((b_tile, 1), f32),       # running sum
        ],
        compiler_params=cparams,
    )(xp, wp, labp)

    # ---- functional version of the in-place `self.bias.data += ...` --------
    bias2d = jnp.asarray(bias, f32).reshape(1, C)
    mean_neg_lse = jnp.mean(neg_lse[:B, 0])
    new_bias = jnp.where(jnp.mean(bias2d) <= 0.0, bias2d + mean_neg_lse, bias2d)
    bias_p = new_bias
    if C != c_pad:
        bias_p = jnp.zeros((1, c_pad), f32).at[:, :C].set(new_bias)

    # ---- pass 2: recomputed cos fused with the BCE loss, per-sample sums ---
    per_sample = pl.pallas_call(
        functools.partial(_bce_loss_kernel, s=float(s), m=float(m),
                          c_actual=C, c_tile=c_tile),
        grid=(nb, nc),
        in_specs=[
            pl.BlockSpec((b_tile, d_pad), lambda b, c: (b, 0)),   # x
            pl.BlockSpec((c_tile, d_pad), lambda b, c: (c, 0)),   # feat_mem (streamed)
            pl.BlockSpec((b_tile, 1), lambda b, c: (b, 0)),       # labels
            pl.BlockSpec((1, c_tile), lambda b, c: (0, c)),       # updated bias
        ],
        out_specs=pl.BlockSpec((b_tile, 1), lambda b, c: (b, 0)),
        out_shape=jax.ShapeDtypeStruct((b_pad, 1), f32),
        scratch_shapes=[
            pltpu.VMEM((b_tile, d_pad), f32),   # cached normalized x
            pltpu.VMEM((b_tile, 1), f32),       # per-row negative-loss sum
            pltpu.VMEM((b_tile, 1), f32),       # per-row target cos
            pltpu.VMEM((b_tile, 1), f32),       # per-row target bias
        ],
        compiler_params=cparams,
    )(xp, wp, labp, bias_p)

    loss = jnp.mean(per_sample[:B, 0])
    return loss, new_bias


# ---------------------------------------------------------------------------
# Pure-JAX reference (mirrors the PyTorch forward exactly).
# ---------------------------------------------------------------------------
def _reference_loss(x, feat_mem, label, bias, *, m=0.1, s=64.0):
    eps = 1e-5
    xn = x / jnp.maximum(jnp.linalg.norm(x, axis=-1, keepdims=True), eps)
    wn = feat_mem / jnp.maximum(
        jnp.linalg.norm(feat_mem, axis=-1, keepdims=True), eps)
    cos = xn @ wn.T
    C = feat_mem.shape[0]
    one_hot = label[:, None] == jnp.arange(C)[None, :]

    z_neg = jnp.where(one_hot, -jnp.inf, s * cos)
    mx = jnp.max(z_neg, axis=-1, keepdims=True)
    cos_txs = (mx + jnp.log(jnp.sum(jnp.exp(z_neg - mx), axis=-1,
                                    keepdims=True)))[:, 0]
    new_bias = jnp.where(jnp.mean(bias) <= 0.0, bias + jnp.mean(cos_txs), bias)

    zp = jnp.clip(s * (cos - m) - new_bias, -s, s)
    zn = jnp.clip(s * cos - new_bias, -s, s)
    p_loss = jnp.log(1.0 + jnp.exp(-zp))
    n_loss = jnp.log(1.0 + jnp.exp(zn))
    loss = jnp.where(one_hot, p_loss, n_loss)
    return jnp.mean(jnp.sum(loss, axis=1)), new_bias


if __name__ == "__main__":
    B = 20
    IN_FEATURES = 40
    OUT_FEATURES = 300

    key = jax.random.PRNGKey(0)
    kx, kw, kl = jax.random.split(key, 3)
    x = jax.random.normal(kx, (B, IN_FEATURES), dtype=jnp.float32)
    feat_mem = jax.random.normal(kw, (OUT_FEATURES, IN_FEATURES), dtype=jnp.float32)
    label = jax.random.randint(kl, (B,), 0, OUT_FEATURES, dtype=jnp.int32)
    bias0 = jnp.zeros((1, OUT_FEATURES), jnp.float32)   # matches Parameter init

    ref_loss, ref_bias = _reference_loss(x, feat_mem, label, bias0, m=0.1, s=64.0)

    # Auto-tiled path (large lane-dense tiles; single C tile for these shapes).
    loss, new_bias = sample_to_sample_bce_loss(x, feat_mem, label, bias0,
                                               m=0.1, s=64.0)
    loss = jax.block_until_ready(loss)
    # Tolerance accounts for MXU vs XLA f32-matmul rounding differences being
    # amplified by s=64 inside the logits (loss magnitude is ~O(30)).
    assert jnp.allclose(loss, ref_loss, rtol=2e-3, atol=5e-2), (loss, ref_loss)
    assert jnp.allclose(new_bias, ref_bias, rtol=2e-3, atol=5e-2)

    # Forced small tiles: exercises the multi-tile online-LSE / row-sum /
    # target-extraction accumulator paths (nb=3, nc=3 for these shapes).
    loss2, new_bias2 = sample_to_sample_bce_loss(
        x, feat_mem, label, bias0, m=0.1, s=64.0, b_tile=8, c_tile=128)
    loss2 = jax.block_until_ready(loss2)
    assert jnp.allclose(loss2, ref_loss, rtol=2e-3, atol=5e-2), (loss2, ref_loss)
    assert jnp.allclose(new_bias2, ref_bias, rtol=2e-3, atol=5e-2)

    print("KERNEL_OK")
</pallas_src>

<mosaic_0001>
module attributes {stable_mosaic.version = 11 : i64} {
  func.func @_neg_lse_kernel(%arg0: i32, %arg1: i32, %arg2: memref<16x128xf32, #tpu.memory_space<vmem>>, %arg3: memref<384x128xf32, #tpu.memory_space<vmem>>, %arg4: memref<16x1xi32, #tpu.memory_space<vmem>>, %arg5: memref<16x1xf32, #tpu.memory_space<vmem>>, %arg6: memref<16x128xf32, #tpu.memory_space<vmem>>, %arg7: memref<16x1xf32, #tpu.memory_space<vmem>>, %arg8: memref<16x1xf32, #tpu.memory_space<vmem>>) attributes {dimension_semantics = [#tpu.dimension_semantics<parallel>, #tpu.dimension_semantics<arbitrary>], iteration_bounds = array<i64: 2, 1>, scalar_prefetch = 0 : i64, scratch_operands = 3 : i64, tpu.core_type = #tpu.core_type<tc>, window_params = [{transform_indices = @transform_0, window_bounds = array<i64: 16, 128>}, {transform_indices = @transform_1, window_bounds = array<i64: 384, 128>}, {transform_indices = @transform_2, window_bounds = array<i64: 16, 1>}, {transform_indices = @transform_3, window_bounds = array<i64: 16, 1>}]} {
    %c0_i32 = arith.constant 0 : i32
    %0 = arith.cmpi eq, %arg1, %c0_i32 : i32
    %1 = arith.extui %0 : i1 to i32
    %c0_i32_0 = arith.constant 0 : i32
    %2 = arith.cmpi ne, %1, %c0_i32_0 : i32
    scf.if %2 {
      %c0_22 = arith.constant 0 : index
      %c0_23 = arith.constant 0 : index
      %47 = vector.load %arg2[%c0_22, %c0_23] : memref<16x128xf32, #tpu.memory_space<vmem>>, vector<16x128xf32>
      %48 = arith.mulf %47, %47 : vector<16x128xf32>
      %cst_24 = arith.constant dense<0.000000e+00> : vector<16xf32>
      %49 = vector.multi_reduction <add>, %48, %cst_24 [1] : vector<16x128xf32> to vector<16xf32>
      %50 = vector.shape_cast %49 : vector<16xf32> to vector<16x1xf32>
      %cst_25 = arith.constant 1.000000e-10 : f32
      %51 = vector.broadcast %cst_25 : f32 to vector<16x1xf32>
      %52 = arith.maximumf %50, %51 : vector<16x1xf32>
      %53 = math.rsqrt %52 : vector<16x1xf32>
      %54 = vector.broadcast %53 : vector<16x1xf32> to vector<16x128xf32>
      %55 = arith.mulf %47, %54 : vector<16x128xf32>
      %c0_26 = arith.constant 0 : index
      %c0_27 = arith.constant 0 : index
      %56 = vector.load %arg6[%c0_26, %c0_27] : memref<16x128xf32, #tpu.memory_space<vmem>>, vector<16x128xf32>
      tpu.vector_store %arg6[%c0_26, %c0_27], %55 {strides = array<i32>} : memref<16x128xf32, #tpu.memory_space<vmem>>, vector<16x128xf32>,
      %cst_28 = arith.constant -1.000000e+30 : f32
      %57 = vector.broadcast %cst_28 : f32 to vector<16x1xf32>
      %c0_29 = arith.constant 0 : index
      %c0_30 = arith.constant 0 : index
      %58 = vector.load %arg7[%c0_29, %c0_30] : memref<16x1xf32, #tpu.memory_space<vmem>>, vector<16x1xf32>
      tpu.vector_store %arg7[%c0_29, %c0_30], %57 {strides = array<i32>} : memref<16x1xf32, #tpu.memory_space<vmem>>, vector<16x1xf32>,
      %cst_31 = arith.constant 0.000000e+00 : f32
      %59 = vector.broadcast %cst_31 : f32 to vector<16x1xf32>
      %c0_32 = arith.constant 0 : index
      %c0_33 = arith.constant 0 : index
      %60 = vector.load %arg8[%c0_32, %c0_33] : memref<16x1xf32, #tpu.memory_space<vmem>>, vector<16x1xf32>
      tpu.vector_store %arg8[%c0_32, %c0_33], %59 {strides = array<i32>} : memref<16x1xf32, #tpu.memory_space<vmem>>, vector<16x1xf32>,
    } else {
    }
    %c0 = arith.constant 0 : index
    %c0_1 = arith.constant 0 : index
    %3 = vector.load %arg3[%c0, %c0_1] : memref<384x128xf32, #tpu.memory_space<vmem>>, vector<384x128xf32>
    %4 = arith.mulf %3, %3 : vector<384x128xf32>
    %cst = arith.constant dense<0.000000e+00> : vector<384xf32>
    %5 = vector.multi_reduction <add>, %4, %cst [1] : vector<384x128xf32> to vector<384xf32>
    %6 = vector.shape_cast %5 : vector<384xf32> to vector<384x1xf32>
    %cst_2 = arith.constant 1.000000e-10 : f32
    %7 = vector.broadcast %cst_2 : f32 to vector<384x1xf32>
    %8 = arith.maximumf %6, %7 : vector<384x1xf32>
    %9 = math.rsqrt %8 : vector<384x1xf32>
    %10 = vector.broadcast %9 : vector<384x1xf32> to vector<384x128xf32>
    %11 = arith.mulf %3, %10 : vector<384x128xf32>
    %c0_3 = arith.constant 0 : index
    %c0_4 = arith.constant 0 : index
    %12 = vector.load %arg6[%c0_3, %c0_4] : memref<16x128xf32, #tpu.memory_space<vmem>>, vector<16x128xf32>
    %cst_5 = arith.constant dense<0.000000e+00> : vector<16x384xf32>
    %13 = tpu.matmul %12, %11, %cst_5 {dimension_numbers = #tpu.dot_dimension_numbers<[1], [1], [0], [0], [0, 0, 1, 0], [], []>} : vector<16x128xf32>, vector<384x128xf32>, vector<16x384xf32> -> vector<16x384xf32>
    %c0_6 = arith.constant 0 : index
    %c0_7 = arith.constant 0 : index
    %14 = vector.load %arg4[%c0_6, %c0_7] : memref<16x1xi32, #tpu.memory_space<vmem>>, vector<16x1xi32>
    %15 = tpu.iota {dimensions = array<i32: 1>} : vector<16x384xi32>
    %c384_i32 = arith.constant 384 : i32
    %16 = arith.muli %arg1, %c384_i32 : i32
    %17 = vector.broadcast %16 : i32 to vector<16x384xi32>
    %18 = arith.addi %15, %17 : vector<16x384xi32>
    %c300_i32 = arith.constant 300 : i32
    %19 = vector.broadcast %c300_i32 : i32 to vector<16x384xi32>
    %20 = arith.cmpi slt, %18, %19 : vector<16x384xi32>
    %21 = vector.broadcast %14 : vector<16x1xi32> to vector<16x384xi32>
    %22 = arith.cmpi ne, %18, %21 : vector<16x384xi32>
    %23 = arith.andi %20, %22 : vector<16x384xi1>
    %cst_8 = arith.constant 6.400000e+01 : f32
    %24 = vector.broadcast %cst_8 : f32 to vector<16x384xf32>
    %25 = arith.mulf %24, %13 : vector<16x384xf32>
    %cst_9 = arith.constant -1.000000e+30 : f32
    %26 = vector.broadcast %cst_9 : f32 to vector<16x384xf32>
    %27 = arith.select %23, %25, %26 : vector<16x384xi1>, vector<16x384xf32>
    %c0_10 = arith.constant 0 : index
    %c0_11 = arith.constant 0 : index
    %28 = vector.load %arg7[%c0_10, %c0_11] : memref<16x1xf32, #tpu.memory_space<vmem>>, vector<16x1xf32>
    %cst_12 = arith.constant dense<0xFF800000> : vector<16xf32>
    %29 = vector.multi_reduction <maximumf>, %27, %cst_12 [1] : vector<16x384xf32> to vector<16xf32>
    %30 = vector.shape_cast %29 : vector<16xf32> to vector<16x1xf32>
    %31 = arith.maximumf %28, %30 : vector<16x1xf32>
    %32 = arith.subf %28, %31 : vector<16x1xf32>
    %33 = math.exp %32 : vector<16x1xf32>
    %c0_13 = arith.constant 0 : index
    %c0_14 = arith.constant 0 : index
    %34 = vector.load %arg8[%c0_13, %c0_14] : memref<16x1xf32, #tpu.memory_space<vmem>>, vector<16x1xf32>
    %35 = arith.mulf %33, %34 : vector<16x1xf32>
    %36 = vector.broadcast %31 : vector<16x1xf32> to vector<16x384xf32>
    %37 = arith.subf %27, %36 : vector<16x384xf32>
    %38 = math.exp %37 : vector<16x384xf32>
    %cst_15 = arith.constant dense<0.000000e+00> : vector<16xf32>
    %39 = vector.multi_reduction <add>, %38, %cst_15 [1] : vector<16x384xf32> to vector<16xf32>
    %40 = vector.shape_cast %39 : vector<16xf32> to vector<16x1xf32>
    %41 = arith.addf %35, %40 : vector<16x1xf32>
    %c0_16 = arith.constant 0 : index
    %c0_17 = arith.constant 0 : index
    %42 = vector.load %arg8[%c0_16, %c0_17] : memref<16x1xf32, #tpu.memory_space<vmem>>, vector<16x1xf32>
    tpu.vector_store %arg8[%c0_16, %c0_17], %41 {strides = array<i32>} : memref<16x1xf32, #tpu.memory_space<vmem>>, vector<16x1xf32>,
    %c0_18 = arith.constant 0 : index
    %c0_19 = arith.constant 0 : index
    %43 = vector.load %arg7[%c0_18, %c0_19] : memref<16x1xf32, #tpu.memory_space<vmem>>, vector<16x1xf32>
    tpu.vector_store %arg7[%c0_18, %c0_19], %31 {strides = array<i32>} : memref<16x1xf32, #tpu.memory_space<vmem>>, vector<16x1xf32>,
    %c0_i32_20 = arith.constant 0 : i32
    %44 = arith.cmpi eq, %arg1, %c0_i32_20 : i32
    %45 = arith.extui %44 : i1 to i32
    %c0_i32_21 = arith.constant 0 : i32
    %46 = arith.cmpi ne, %45, %c0_i32_21 : i32
    scf.if %46 {
      %c0_22 = arith.constant 0 : index
      %c0_23 = arith.constant 0 : index
      %47 = vector.load %arg7[%c0_22, %c0_23] : memref<16x1xf32, #tpu.memory_space<vmem>>, vector<16x1xf32>
      %c0_24 = arith.constant 0 : index
      %c0_25 = arith.constant 0 : index
      %48 = vector.load %arg8[%c0_24, %c0_25] : memref<16x1xf32, #tpu.memory_space<vmem>>, vector<16x1xf32>
      %49 = math.log %48 : vector<16x1xf32>
      %50 = arith.addf %47, %49 : vector<16x1xf32>
      %c0_26 = arith.constant 0 : index
      %c0_27 = arith.constant 0 : index
      %51 = vector.load %arg5[%c0_26, %c0_27] : memref<16x1xf32, #tpu.memory_space<vmem>>, vector<16x1xf32>
      tpu.vector_store %arg5[%c0_26, %c0_27], %50 {strides = array<i32>} : memref<16x1xf32, #tpu.memory_space<vmem>>, vector<16x1xf32>,
    } else {
    }
    return
  }
  func.func @transform_0(%arg0: i32, %arg1: i32) -> (i32, i32) {
    %c0_i32 = arith.constant 0 : i32
    %c0_i32_0 = arith.constant 0 : i32
    return %arg0, %c0_i32 : i32, i32
  }
  func.func @transform_1(%arg0: i32, %arg1: i32) -> (i32, i32) {
    %c0_i32 = arith.constant 0 : i32
    %c0_i32_0 = arith.constant 0 : i32
    return %arg1, %c0_i32 : i32, i32
  }
  func.func @transform_2(%arg0: i32, %arg1: i32) -> (i32, i32) {
    %c0_i32 = arith.constant 0 : i32
    %c0_i32_0 = arith.constant 0 : i32
    return %arg0, %c0_i32 : i32, i32
  }
  func.func @transform_3(%arg0: i32, %arg1: i32) -> (i32, i32) {
    %c0_i32 = arith.constant 0 : i32
    %c0_i32_0 = arith.constant 0 : i32
    return %arg0, %c0_i32 : i32, i32
  }
}

</mosaic_0001>

<llo_original>
// kernel: tpu_custom_call.1
$region0: #{tpu_custom_call.1}
  #allocation0 [shape = 'u32[]', space=smem, size = 0x4, offset = 0x4, fixed_abs, tag = 'smem constant byte address 0x4 - core index']
  #allocation1 [shape = 'u32[144,128]{1,0:T(1,128)}', space=vmem, size = 0x12000, scoped, tag = 'internal scratch']
  #allocation2 [shape = 'f32[16,128]{1,0:T(8,128)}', space=vmem, size = 0x2000, scoped, tag = 'scratch operand']
  #allocation3 [shape = 'f32[16,1]{1,0:T(8,128)}', space=vmem, size = 0x2000, scoped, tag = 'scratch operand']
  #allocation4 [shape = 'f32[16,1]{1,0:T(8,128)}', space=vmem, size = 0x2000, scoped, tag = 'scratch operand']
  %s0 = inlined_call_operand.vmem [shape: f32[32,128], index: 0, kind: input, shape index: {}]
  %s1 = inlined_call_operand.hbm [shape: f32[384,128], index: 1, kind: input, shape index: {}]
  %s2 = inlined_call_operand.vmem [shape: s32[32,1], index: 2, kind: input, shape index: {}]
  %s3 = inlined_call_operand.vmem [shape: f32[32,1], index: 3, kind: output, shape index: {}]
  %s4 = sld [smem:[#allocation0]]
  $region57: #{tpu_custom_call.1} parent=0
    _
  %s6 = ssub.s32 1, %s4
  %s7 = scalar_select 0, %s6, %s4
  $region1: #{tpu_custom_call.1} parent=0
    #allocation5 [shape = 'u8[196608]{0}', space=vmem, size = 0x30000, scoped, tag = 'input window, operand 1, single buffered']
    #allocation6 [shape = 's32[2]{0}', space=sflag, size = 0x8, scoped, tag = 'scoped memory for tpu_custom_call.1']
    %8 = vsyncpa [#allocation6], 0
    loop: start=0, step=1, limit=4
    $region2: #{tpu_custom_call.1} parent=1 // loop_pre_header
      _
    $region3: #{tpu_custom_call.1} parent=1 // loop_header
      %s10 = sphi 0, %s14
      %p11 = scmp.ge.s32.totalorder %s10, 4
      %s17 = sphi 0, %s29
      %s18 = sphi 0, %s25
      %s19 = sphi 0, %s17
      %s20 = sphi 0, %s18
      %s21 = sphi 0, %s19
      %s22 = sphi 0, %s20
      %s32 = sphi 0, %s34
      %s35 = sphi 0, %s32
      %s36 = sphi 0, %s35
      %s52 = sphi 0, %s36
      %s58 = sphi 0, %s60
      %s61 = sphi 0, %s58
      %s62 = sphi 0, %s61
      %s78 = sphi 0, %s62
      %s84 = sphi 0, %s86
      %s87 = sphi 0, %s84
      %s88 = sphi 0, %s87
      %s104 = sphi 0, %s88
      %s110 = sphi 0, %s112
      %s113 = sphi 0, %s110
      %s114 = sphi 0, %s113
      %s130 = sphi 0, %s114
    $region4: #{tpu_custom_call.1} parent=1 // loop_header_branch
      %13 = sbr.rel (%p11) target = $region8
    $region5: #{tpu_custom_call.1} parent=1 // loop_body
      %s15 = ssub.s32 %s10, 1
      %s16 = ssub.s32 %s10, 2
      %s23 = sadd.s32 1, %s18
      %p24 = scmp.ge.s32.totalorder %s23, 1
      %s25 = scalar_select %p24, 0, %s23
      %s26 = sadd.s32 1, %s17
      %s27 = scalar_select %p24, %s26, %s17
      %p28 = scmp.ge.s32.totalorder %s27, 2
      %s29 = scalar_select %p28, 0, %s27
      %s30 = ssub.s32 %s17, %s29
      %p31 = scmp.eq.s32.totalorder %s30, 0
      %s33 = sadd.s32 %s32, 1
      %s34 = scalar_select %p31, %s32, %s33
      %p37 = pneg %p31
      %p38 = scmp.eq.s32.totalorder %s10, 1
      %p39 = por %p37, %p38
      %p40 = scmp.ne.s32.totalorder %s32, %s35
      %p41 = scmp.eq.s32.totalorder %s10, 0
      %p42 = por %p40, %p41
      %p43 = scmp.ne.s32.totalorder %s32, %s35
      %p44 = scmp.eq.s32.totalorder %s15, 1
      %p45 = por %p43, %p44
      %p46 = scmp.ne.s32.totalorder %s35, %s36
      %p47 = scmp.eq.s32.totalorder %s15, 0
      %p48 = por %p46, %p47
      %p49 = scmp.ne.s32.totalorder %s35, %s36
      %p50 = scmp.eq.s32.totalorder %s16, 1
      %p51 = por %p49, %p50
      %p53 = scmp.ne.s32.totalorder %s36, %s52
      %p54 = scmp.eq.s32.totalorder %s16, 0
      %p55 = por %p53, %p54
      %s56 = ssub.s32 %s18, %s25
      %p57 = scmp.eq.s32.totalorder %s56, 0
      %s59 = sadd.s32 %s58, 1
      %s60 = scalar_select %p57, %s58, %s59
      %p63 = pneg %p57
      %p64 = scmp.eq.s32.totalorder %s10, 1
      %p65 = por %p63, %p64
      %p66 = scmp.ne.s32.totalorder %s58, %s61
      %p67 = scmp.eq.s32.totalorder %s10, 0
      %p68 = por %p66, %p67
      %p69 = scmp.ne.s32.totalorder %s58, %s61
      %p70 = scmp.eq.s32.totalorder %s15, 1
      %p71 = por %p69, %p70
      %p72 = scmp.ne.s32.totalorder %s61, %s62
      %p73 = scmp.eq.s32.totalorder %s15, 0
      %p74 = por %p72, %p73
      %p75 = scmp.ne.s32.totalorder %s61, %s62
      %p76 = scmp.eq.s32.totalorder %s16, 1
      %p77 = por %p75, %p76
      %p79 = scmp.ne.s32.totalorder %s62, %s78
      %p80 = scmp.eq.s32.totalorder %s16, 0
      %p81 = por %p79, %p80
      %s82 = ssub.s32 %s17, %s29
      %p83 = scmp.eq.s32.totalorder %s82, 0
      %s85 = sadd.s32 %s84, 1
      %s86 = scalar_select %p83, %s84, %s85
      %p89 = pneg %p83
      %p90 = scmp.eq.s32.totalorder %s10, 1
      %p91 = por %p89, %p90
      %p92 = scmp.ne.s32.totalorder %s84, %s87
      %p93 = scmp.eq.s32.totalorder %s10, 0
      %p94 = por %p92, %p93
      %p95 = scmp.ne.s32.totalorder %s84, %s87
      %p96 = scmp.eq.s32.totalorder %s15, 1
      %p97 = por %p95, %p96
      %p98 = scmp.ne.s32.totalorder %s87, %s88
      %p99 = scmp.eq.s32.totalorder %s15, 0
      %p100 = por %p98, %p99
      %p101 = scmp.ne.s32.totalorder %s87, %s88
      %p102 = scmp.eq.s32.totalorder %s16, 1
      %p103 = por %p101, %p102
      %p105 = scmp.ne.s32.totalorder %s88, %s104
      %p106 = scmp.eq.s32.totalorder %s16, 0
      %p107 = por %p105, %p106
      %s108 = ssub.s32 %s17, %s29
      %p109 = scmp.eq.s32.totalorder %s108, 0
      %s111 = sadd.s32 %s110, 1
      %s112 = scalar_select %p109, %s110, %s111
      %p115 = pneg %p109
      %p116 = scmp.eq.s32.totalorder %s10, 1
      %p117 = por %p115, %p116
      %p118 = scmp.ne.s32.totalorder %s110, %s113
      %p119 = scmp.eq.s32.totalorder %s10, 0
      %p120 = por %p118, %p119
      %p121 = scmp.ne.s32.totalorder %s110, %s113
      %p122 = scmp.eq.s32.totalorder %s15, 1
      %p123 = por %p121, %p122
      %p124 = scmp.ne.s32.totalorder %s113, %s114
      %p125 = scmp.eq.s32.totalorder %s15, 0
      %p126 = por %p124, %p125
      %p127 = scmp.ne.s32.totalorder %s113, %s114
      %p128 = scmp.eq.s32.totalorder %s16, 1
      %p129 = por %p127, %p128
      %p131 = scmp.ne.s32.totalorder %s114, %s130
      %p132 = scmp.eq.s32.totalorder %s16, 0
      %p133 = por %p131, %p132
      %p134 = scmp.le.s32.totalorder 1, %s10
      %p135 = scmp.lt.s32.totalorder %s10, 3
      %p136 = pnand %p134, %p135
      %p137 = pneg %p136
      // Predicated region
      $region9: #{tpu_custom_call.1} parent=5 // pred_check
        _
      $region10: #{tpu_custom_call.1} parent=5 // pred_check_branch
        %139 = sbr.rel (%p136) target = $region12
      $region11: #{tpu_custom_call.1} parent=5 // pred_region
        %s140 = ssub.s32 %s10, 1
        // Predicated region
        $region13: #{tpu_custom_call.1} parent=11 // pred_check
          %p141 = pneg %p74
        $region14: #{tpu_custom_call.1} parent=11 // pred_check_branch
          %143 = sbr.rel (%p141) target = $region16
        $region15: #{tpu_custom_call.1} parent=11 // pred_region
          %s144 = smul.u32 48, %s20
          %s146 = ssub.s32 6144, 6144
          %147 = vsyncadd [#allocation6], %s146
          %s148 = smul.addr %s144, 128
          %s149 = scalar_lea.hbm %s1, %s148
          %s150 = sshll.u32 [#allocation5], 4
          %s151 = int_to_ptr.vmem [resolvable:$true] %s150
          %156 = dma.hbm_to_vmem [thread:$0]  %s149, 6144, %s151, [#allocation6], 128, 128, 8
        $region16: #{tpu_custom_call.1} parent=11 // pred_fallthru
          _
      $region12: #{tpu_custom_call.1} parent=5 // pred_fallthru
        _
      %p157 = scmp.lt.s32.totalorder %s10, 2
      // Predicated region
      $region17: #{tpu_custom_call.1} parent=5 // pred_check
        %p158 = pneg %p157
      $region18: #{tpu_custom_call.1} parent=5 // pred_check_branch
        %160 = sbr.rel (%p158) target = $region20
      $region19: #{tpu_custom_call.1} parent=5 // pred_region
        // Predicated region
        $region21: #{tpu_custom_call.1} parent=19 // pred_check
          %p161 = pneg %p42
        $region22: #{tpu_custom_call.1} parent=19 // pred_check_branch
          %163 = sbr.rel (%p161) target = $region24
        $region23: #{tpu_custom_call.1} parent=19 // pred_region
          %s164 = smul.u32 2, %s17
          %p165 = scmp.lt.s32.totalorder %s164, 3
          %s166 = scalar_select %p165, %s164, 3
          %s167 = smul.addr %s166, 8
          %s168 = scalar_lea.vmem %s0, %s167
          %s169 = smul.u32 2, %s17
        $region24: #{tpu_custom_call.1} parent=19 // pred_fallthru
          _
        // Predicated region
        $region25: #{tpu_custom_call.1} parent=19 // pred_check
          %p170 = pneg %p94
        $region26: #{tpu_custom_call.1} parent=19 // pred_check_branch
          %172 = sbr.rel (%p170) target = $region28
        $region27: #{tpu_custom_call.1} parent=19 // pred_region
          %s173 = smul.u32 2, %s17
          %p174 = scmp.lt.s32.totalorder %s173, 3
          %s175 = scalar_select %p174, %s173, 3
          %s176 = smul.addr %s175, 8
          %s177 = scalar_lea.vmem %s2, %s176
          %s178 = smul.u32 2, %s17
        $region28: #{tpu_custom_call.1} parent=19 // pred_fallthru
          _
      $region20: #{tpu_custom_call.1} parent=5 // pred_fallthru
        _
      %p179 = scmp.le.s32.totalorder 1, %s10
      %p180 = scmp.lt.s32.totalorder %s10, 3
      %p181 = pnand %p179, %p180
      %p182 = pneg %p181
      // Predicated region
      $region29: #{tpu_custom_call.1} parent=5 // pred_check
        _
      $region30: #{tpu_custom_call.1} parent=5 // pred_check_branch
        %184 = sbr.rel (%p181) target = $region32
      $region31: #{tpu_custom_call.1} parent=5 // pred_region
        %s185 = ssub.s32 %s10, 1
        // Predicated region
        $region33: #{tpu_custom_call.1} parent=31 // pred_check
          %p186 = pneg %p74
        $region34: #{tpu_custom_call.1} parent=31 // pred_check_branch
          %188 = sbr.rel (%p186) target = $region36
        $region35: #{tpu_custom_call.1} parent=31 // pred_region
          %189 = dma.done [#allocation6], 6144
        $region36: #{tpu_custom_call.1} parent=31 // pred_fallthru
          _
        %s190 = smul.u32 2, %s19
        %p191 = scmp.lt.s32.totalorder %s190, 3
        %s192 = scalar_select %p191, %s190, 3
        %s193 = smul.addr %s192, 8
        %s194 = scalar_lea.vmem %s0, %s193
        %p195 = pneg %p48
        %p196 = pneg %p45
        %p197 = pneg %p74
        %p198 = pneg %p71
        %s199 = smul.u32 2, %s19
        %p200 = scmp.lt.s32.totalorder %s199, 3
        %s201 = scalar_select %p200, %s199, 3
        %s202 = smul.addr %s201, 8
        %s203 = scalar_lea.vmem %s2, %s202
        %p204 = pneg %p100
        %p205 = pneg %p97
        %p206 = pneg %p126
        %p207 = pneg %p123
        %s208 = smul.u32 2, %s19
        %p209 = scmp.lt.s32.totalorder %s208, 3
        %s210 = scalar_select %p209, %s208, 3
        %s211 = smul.addr %s210, 8
        %s212 = scalar_lea.vmem %s3, %s211
        %s213 = smul.u32 2, %s19
        %p214 = scmp.lt.s32.totalorder %s213, 3
        %s215 = scalar_select %p214, %s213, 3
        %s216 = smul.addr %s215, 8
        %s217 = scalar_lea.vmem %s0, %s216
        %s218 = smul.u32 2, %s19
        %s219 = smul.u32 48, %s20
        %s220 = smul.u32 2, %s19
        %p221 = scmp.lt.s32.totalorder %s220, 3
        %s222 = scalar_select %p221, %s220, 3
        %s223 = smul.addr %s222, 8
        %s224 = scalar_lea.vmem %s2, %s223
        %s225 = smul.u32 2, %s19
        %s226 = smul.u32 2, %s19
        %p227 = scmp.lt.s32.totalorder %s226, 3
        %s228 = scalar_select %p227, %s226, 3
        %s229 = smul.addr %s228, 8
        %s230 = scalar_lea.vmem %s3, %s229
        %s231 = smul.u32 2, %s19
        %p232 = scmp.eq.s32.totalorder %s20, 0
        // Predicated region
        $region37: #{tpu_custom_call.1} parent=31 // pred_check
          %p233 = pneg %p232
        $region38: #{tpu_custom_call.1} parent=31 // pred_check_branch
          %235 = sbr.rel (%p233) target = $region40
        $region39: #{tpu_custom_call.1} parent=31 // pred_region
          %v236 = vld [vmem:[%s217] sm:$0xff]
          %v237 = vld [vmem:[%s217 + $0x8] sm:$0xff]
          %v238 = vmul.f32 %v236, %v236
          %v239 = vmul.f32 %v237, %v237
          %240 = vadd.xlane.f32.xlu0 %v238
          %v241 = vpop.xlane.xlu0 %240
          %242 = vadd.xlane.f32.xlu0 %v239
          %v243 = vpop.xlane.xlu0 %242
          %v244 = vmax.f32 %v241, 1e-10
          %v245 = vmax.f32 %v243, 1e-10
          %v246 = vrsqrt.pop %v244
          %v247 = vrsqrt.pop %v245
          %v248 = vmul.f32 %v236, %v246
          %v249 = vmul.f32 %v237, %v247
          %250 = vst [vmem:[#allocation2] sm:$0xff] %v248
          %251 = vst [vmem:[#allocation2 + $0x8] sm:$0xff] %v249
          %vm252 = vcmask 7168
          %253 = vst.msk [vmem:[#allocation3] sm:$0xff] %vm252, -1e+30
          %254 = vst.msk [vmem:[#allocation3 + $0x8] sm:$0xff] %vm252, -1e+30
          %255 = vst.msk [vmem:[#allocation4] sm:$0xff] %vm252, 0.0
          %256 = vst.msk [vmem:[#allocation4 + $0x8] sm:$0xff] %vm252, 0.0
        $region40: #{tpu_custom_call.1} parent=31 // pred_fallthru
          _
        %v257 = vld [vmem:[#allocation5] sm:$0xff]
        %v258 = vld [vmem:[#allocation5 + $0x8] sm:$0xff]
        %v259 = vld [vmem:[#allocation5 + $0x10] sm:$0xff]
        %v260 = vld [vmem:[#allocation5 + $0x18] sm:$0xff]
        %v261 = vld [vmem:[#allocation5 + $0x20] sm:$0xff]
        %v262 = vld [vmem:[#allocation5 + $0x28] sm:$0xff]
        %v263 = vld [vmem:[#allocation5 + $0x30] sm:$0xff]
        %v264 = vld [vmem:[#allocation5 + $0x38] sm:$0xff]
        %v265 = vld [vmem:[#allocation5 + $0x40] sm:$0xff]
        %v266 = vld [vmem:[#allocation5 + $0x48] sm:$0xff]
        %v267 = vld [vmem:[#allocation5 + $0x50] sm:$0xff]
        %v268 = vld [vmem:[#allocation5 + $0x58] sm:$0xff]
        %v269 = vld [vmem:[#allocation5 + $0x60] sm:$0xff]
        %v270 = vld [vmem:[#allocation5 + $0x68] sm:$0xff]
        %v271 = vld [vmem:[#allocation5 + $0x70] sm:$0xff]
        %v272 = vld [vmem:[#allocation5 + $0x78] sm:$0xff]
        %v273 = vld [vmem:[#allocation5 + $0x80] sm:$0xff]
        %v274 = vld [vmem:[#allocation5 + $0x88] sm:$0xff]
        %v275 = vld [vmem:[#allocation5 + $0x90] sm:$0xff]
        %v276 = vld [vmem:[#allocation5 + $0x98] sm:$0xff]
        %v277 = vld [vmem:[#allocation5 + $0xa0] sm:$0xff]
        %v278 = vld [vmem:[#allocation5 + $0xa8] sm:$0xff]
        %v279 = vld [vmem:[#allocation5 + $0xb0] sm:$0xff]
        %v280 = vld [vmem:[#allocation5 + $0xb8] sm:$0xff]
        %v281 = vld [vmem:[#allocation5 + $0xc0] sm:$0xff]
        %v282 = vld [vmem:[#allocation5 + $0xc8] sm:$0xff]
        %v283 = vld [vmem:[#allocation5 + $0xd0] sm:$0xff]
        %v284 = vld [vmem:[#allocation5 + $0xd8] sm:$0xff]
        %v285 = vld [vmem:[#allocation5 + $0xe0] sm:$0xff]
        %v286 = vld [vmem:[#allocation5 + $0xe8] sm:$0xff]
        %v287 = vld [vmem:[#allocation5 + $0xf0] sm:$0xff]
        %v288 = vld [vmem:[#allocation5 + $0xf8] sm:$0xff]
        %v289 = vld [vmem:[#allocation5 + $0x100] sm:$0xff]
        %v290 = vld [vmem:[#allocation5 + $0x108] sm:$0xff]
        %v291 = vld [vmem:[#allocation5 + $0x110] sm:$0xff]
        %v292 = vld [vmem:[#allocation5 + $0x118] sm:$0xff]
        %v293 = vld [vmem:[#allocation5 + $0x120] sm:$0xff]
        %v294 = vld [vmem:[#allocation5 + $0x128] sm:$0xff]
        %v295 = vld [vmem:[#allocation5 + $0x130] sm:$0xff]
        %v296 = vld [vmem:[#allocation5 + $0x138] sm:$0xff]
        %v297 = vld [vmem:[#allocation5 + $0x140] sm:$0xff]
        %v298 = vld [vmem:[#allocation5 + $0x148] sm:$0xff]
        %v299 = vld [vmem:[#allocation5 + $0x150] sm:$0xff]
        %v300 = vld [vmem:[#allocation5 + $0x158] sm:$0xff]
        %v301 = vld [vmem:[#allocation5 + $0x160] sm:$0xff]
        %v302 = vld [vmem:[#allocation5 + $0x168] sm:$0xff]
        %v303 = vld [vmem:[#allocation5 + $0x170] sm:$0xff]
        %v304 = vld [vmem:[#allocation5 + $0x178] sm:$0xff]
        %v305 = vmul.f32 %v257, %v257
        %v306 = vmul.f32 %v258, %v258
        %v307 = vmul.f32 %v259, %v259
        %v308 = vmul.f32 %v260, %v260
        %v309 = vmul.f32 %v261, %v261
        %v310 = vmul.f32 %v262, %v262
        %v311 = vmul.f32 %v263, %v263
        %v312 = vmul.f32 %v264, %v264
        %v313 = vmul.f32 %v265, %v265
        %v314 = vmul.f32 %v266, %v266
        %v315 = vmul.f32 %v267, %v267
        %v316 = vmul.f32 %v268, %v268
        %v317 = vmul.f32 %v269, %v269
        %v318 = vmul.f32 %v270, %v270
        %v319 = vmul.f32 %v271, %v271
        %v320 = vmul.f32 %v272, %v272
        %v321 = vmul.f32 %v273, %v273
        %v322 = vmul.f32 %v274, %v274
        %v323 = vmul.f32 %v275, %v275
        %v324 = vmul.f32 %v276, %v276
        %v325 = vmul.f32 %v277, %v277
        %v326 = vmul.f32 %v278, %v278
        %v327 = vmul.f32 %v279, %v279
        %v328 = vmul.f32 %v280, %v280
        %v329 = vmul.f32 %v281, %v281
        %v330 = vmul.f32 %v282, %v282
        %v331 = vmul.f32 %v283, %v283
        %v332 = vmul.f32 %v284, %v284
        %v333 = vmul.f32 %v285, %v285
        %v334 = vmul.f32 %v286, %v286
        %v335 = vmul.f32 %v287, %v287
        %v336 = vmul.f32 %v288, %v288
        %v337 = vmul.f32 %v289, %v289
        %v338 = vmul.f32 %v290, %v290
        %v339 = vmul.f32 %v291, %v291
        %v340 = vmul.f32 %v292, %v292
        %v341 = vmul.f32 %v293, %v293
        %v342 = vmul.f32 %v294, %v294
        %v343 = vmul.f32 %v295, %v295
        %v344 = vmul.f32 %v296, %v296
        %v345 = vmul.f32 %v297, %v297
        %v346 = vmul.f32 %v298, %v298
        %v347 = vmul.f32 %v299, %v299
        %v348 = vmul.f32 %v300, %v300
        %v349 = vmul.f32 %v301, %v301
        %v350 = vmul.f32 %v302, %v302
        %v351 = vmul.f32 %v303, %v303
        %v352 = vmul.f32 %v304, %v304
        %353 = vadd.xlane.f32.xlu0 %v305
        %v354 = vpop.xlane.xlu0 %353
        %355 = vadd.xlane.f32.xlu0 %v306
        %v356 = vpop.xlane.xlu0 %355
        %357 = vadd.xlane.f32.xlu0 %v307
        %v358 = vpop.xlane.xlu0 %357
        %359 = vadd.xlane.f32.xlu0 %v308
        %v360 = vpop.xlane.xlu0 %359
        %361 = vadd.xlane.f32.xlu0 %v309
        %v362 = vpop.xlane.xlu0 %361
        %363 = vadd.xlane.f32.xlu0 %v310
        %v364 = vpop.xlane.xlu0 %363
        %365 = vadd.xlane.f32.xlu0 %v311
        %v366 = vpop.xlane.xlu0 %365
        %367 = vadd.xlane.f32.xlu0 %v312
        %v368 = vpop.xlane.xlu0 %367
        %369 = vadd.xlane.f32.xlu0 %v313
        %v370 = vpop.xlane.xlu0 %369
        %371 = vadd.xlane.f32.xlu0 %v314
        %v372 = vpop.xlane.xlu0 %371
        %373 = vadd.xlane.f32.xlu0 %v315
        %v374 = vpop.xlane.xlu0 %373
        %375 = vadd.xlane.f32.xlu0 %v316
        %v376 = vpop.xlane.xlu0 %375
        %377 = vadd.xlane.f32.xlu0 %v317
        %v378 = vpop.xlane.xlu0 %377
        %379 = vadd.xlane.f32.xlu0 %v318
        %v380 = vpop.xlane.xlu0 %379
        %381 = vadd.xlane.f32.xlu0 %v319
        %v382 = vpop.xlane.xlu0 %381
        %383 = vadd.xlane.f32.xlu0 %v320
        %v384 = vpop.xlane.xlu0 %383
        %385 = vadd.xlane.f32.xlu0 %v321
        %v386 = vpop.xlane.xlu0 %385
        %387 = vadd.xlane.f32.xlu0 %v322
        %v388 = vpop.xlane.xlu0 %387
        %389 = vadd.xlane.f32.xlu0 %v323
        %v390 = vpop.xlane.xlu0 %389
        %391 = vadd.xlane.f32.xlu0 %v324
        %v392 = vpop.xlane.xlu0 %391
        %393 = vadd.xlane.f32.xlu0 %v325
        %v394 = vpop.xlane.xlu0 %393
        %395 = vadd.xlane.f32.xlu0 %v326
        %v396 = vpop.xlane.xlu0 %395
        %397 = vadd.xlane.f32.xlu0 %v327
        %v398 = vpop.xlane.xlu0 %397
        %399 = vadd.xlane.f32.xlu0 %v328
        %v400 = vpop.xlane.xlu0 %399
        %401 = vadd.xlane.f32.xlu0 %v329
        %v402 = vpop.xlane.xlu0 %401
        %403 = vadd.xlane.f32.xlu0 %v330
        %v404 = vpop.xlane.xlu0 %403
        %405 = vadd.xlane.f32.xlu0 %v331
        %v406 = vpop.xlane.xlu0 %405
        %407 = vadd.xlane.f32.xlu0 %v332
        %v408 = vpop.xlane.xlu0 %407
        %409 = vadd.xlane.f32.xlu0 %v333
        %v410 = vpop.xlane.xlu0 %409
        %411 = vadd.xlane.f32.xlu0 %v334
        %v412 = vpop.xlane.xlu0 %411
        %413 = vadd.xlane.f32.xlu0 %v335
        %v414 = vpop.xlane.xlu0 %413
        %415 = vadd.xlane.f32.xlu0 %v336
        %v416 = vpop.xlane.xlu0 %415
        %417 = vadd.xlane.f32.xlu0 %v337
        %v418 = vpop.xlane.xlu0 %417
        %419 = vadd.xlane.f32.xlu0 %v338
        %v420 = vpop.xlane.xlu0 %419
        %421 = vadd.xlane.f32.xlu0 %v339
        %v422 = vpop.xlane.xlu0 %421
        %423 = vadd.xlane.f32.xlu0 %v340
        %v424 = vpop.xlane.xlu0 %423
        %425 = vadd.xlane.f32.xlu0 %v341
        %v426 = vpop.xlane.xlu0 %425
        %427 = vadd.xlane.f32.xlu0 %v342
        %v428 = vpop.xlane.xlu0 %427
        %429 = vadd.xlane.f32.xlu0 %v343
        %v430 = vpop.xlane.xlu0 %429
        %431 = vadd.xlane.f32.xlu0 %v344
        %v432 = vpop.xlane.xlu0 %431
        %433 = vadd.xlane.f32.xlu0 %v345
        %v434 = vpop.xlane.xlu0 %433
        %435 = vadd.xlane.f32.xlu0 %v346
        %v436 = vpop.xlane.xlu0 %435
        %437 = vadd.xlane.f32.xlu0 %v347
        %v438 = vpop.xlane.xlu0 %437
        %439 = vadd.xlane.f32.xlu0 %v348
        %v440 = vpop.xlane.xlu0 %439
        %441 = vadd.xlane.f32.xlu0 %v349
        %v442 = vpop.xlane.xlu0 %441
        %443 = vadd.xlane.f32.xlu0 %v350
        %v444 = vpop.xlane.xlu0 %443
        %445 = vadd.xlane.f32.xlu0 %v351
        %v446 = vpop.xlane.xlu0 %445
        %447 = vadd.xlane.f32.xlu0 %v352
        %v448 = vpop.xlane.xlu0 %447
        %v449 = vmax.f32 %v354, 1e-10
        %v450 = vmax.f32 %v356, 1e-10
        %v451 = vmax.f32 %v358, 1e-10
        %v452 = vmax.f32 %v360, 1e-10
        %v453 = vmax.f32 %v362, 1e-10
        %v454 = vmax.f32 %v364, 1e-10
        %v455 = vmax.f32 %v366, 1e-10
        %v456 = vmax.f32 %v368, 1e-10
        %v457 = vmax.f32 %v370, 1e-10
        %v458 = vmax.f32 %v372, 1e-10
        %v459 = vmax.f32 %v374, 1e-10
        %v460 = vmax.f32 %v376, 1e-10
        %v461 = vmax.f32 %v378, 1e-10
        %v462 = vmax.f32 %v380, 1e-10
        %v463 = vmax.f32 %v382, 1e-10
        %v464 = vmax.f32 %v384, 1e-10
        %v465 = vmax.f32 %v386, 1e-10
        %v466 = vmax.f32 %v388, 1e-10
        %v467 = vmax.f32 %v390, 1e-10
        %v468 = vmax.f32 %v392, 1e-10
        %v469 = vmax.f32 %v394, 1e-10
        %v470 = vmax.f32 %v396, 1e-10
        %v471 = vmax.f32 %v398, 1e-10
        %v472 = vmax.f32 %v400, 1e-10
        %v473 = vmax.f32 %v402, 1e-10
        %v474 = vmax.f32 %v404, 1e-10
        %v475 = vmax.f32 %v406, 1e-10
        %v476 = vmax.f32 %v408, 1e-10
        %v477 = vmax.f32 %v410, 1e-10
        %v478 = vmax.f32 %v412, 1e-10
        %v479 = vmax.f32 %v414, 1e-10
        %v480 = vmax.f32 %v416, 1e-10
        %v481 = vmax.f32 %v418, 1e-10
        %v482 = vmax.f32 %v420, 1e-10
        %v483 = vmax.f32 %v422, 1e-10
        %v484 = vmax.f32 %v424, 1e-10
        %v485 = vmax.f32 %v426, 1e-10
        %v486 = vmax.f32 %v428, 1e-10
        %v487 = vmax.f32 %v430, 1e-10
        %v488 = vmax.f32 %v432, 1e-10
        %v489 = vmax.f32 %v434, 1e-10
        %v490 = vmax.f32 %v436, 1e-10
        %v491 = vmax.f32 %v438, 1e-10
        %v492 = vmax.f32 %v440, 1e-10
        %v493 = vmax.f32 %v442, 1e-10
        %v494 = vmax.f32 %v444, 1e-10
        %v495 = vmax.f32 %v446, 1e-10
        %v496 = vmax.f32 %v448, 1e-10
        %v497 = vrsqrt.pop %v449
        %v498 = vrsqrt.pop %v450
        %v499 = vrsqrt.pop %v451
        %v500 = vrsqrt.pop %v452
        %v501 = vrsqrt.pop %v453
        %v502 = vrsqrt.pop %v454
        %v503 = vrsqrt.pop %v455
        %v504 = vrsqrt.pop %v456
        %v505 = vrsqrt.pop %v457
        %v506 = vrsqrt.pop %v458
        %v507 = vrsqrt.pop %v459
        %v508 = vrsqrt.pop %v460
        %v509 = vrsqrt.pop %v461
        %v510 = vrsqrt.pop %v462
        %v511 = vrsqrt.pop %v463
        %v512 = vrsqrt.pop %v464
        %v513 = vrsqrt.pop %v465
        %v514 = vrsqrt.pop %v466
        %v515 = vrsqrt.pop %v467
        %v516 = vrsqrt.pop %v468
        %v517 = vrsqrt.pop %v469
        %v518 = vrsqrt.pop %v470
        %v519 = vrsqrt.pop %v471
        %v520 = vrsqrt.pop %v472
        %v521 = vrsqrt.pop %v473
        %v522 = vrsqrt.pop %v474
        %v523 = vrsqrt.pop %v475
        %v524 = vrsqrt.pop %v476
        %v525 = vrsqrt.pop %v477
        %v526 = vrsqrt.pop %v478
        %v527 = vrsqrt.pop %v479
        %v528 = vrsqrt.pop %v480
        %v529 = vrsqrt.pop %v481
        %v530 = vrsqrt.pop %v482
        %v531 = vrsqrt.pop %v483
        %v532 = vrsqrt.pop %v484
        %v533 = vrsqrt.pop %v485
        %v534 = vrsqrt.pop %v486
        %v535 = vrsqrt.pop %v487
        %v536 = vrsqrt.pop %v488
        %v537 = vrsqrt.pop %v489
        %v538 = vrsqrt.pop %v490
        %v539 = vrsqrt.pop %v491
        %v540 = vrsqrt.pop %v492
        %v541 = vrsqrt.pop %v493
        %v542 = vrsqrt.pop %v494
        %v543 = vrsqrt.pop %v495
        %v544 = vrsqrt.pop %v496
        %v545 = vmul.f32 %v257, %v497
        %v546 = vmul.f32 %v258, %v498
        %v547 = vmul.f32 %v259, %v499
        %v548 = vmul.f32 %v260, %v500
        %v549 = vmul.f32 %v261, %v501
        %v550 = vmul.f32 %v262, %v502
        %v551 = vmul.f32 %v263, %v503
        %v552 = vmul.f32 %v264, %v504
        %v553 = vmul.f32 %v265, %v505
        %v554 = vmul.f32 %v266, %v506
        %v555 = vmul.f32 %v267, %v507
        %v556 = vmul.f32 %v268, %v508
        %v557 = vmul.f32 %v269, %v509
        %v558 = vmul.f32 %v270, %v510
        %v559 = vmul.f32 %v271, %v511
        %v560 = vmul.f32 %v272, %v512
        %v561 = vmul.f32 %v273, %v513
        %v562 = vmul.f32 %v274, %v514
        %v563 = vmul.f32 %v275, %v515
        %v564 = vmul.f32 %v276, %v516
        %v565 = vmul.f32 %v277, %v517
        %v566 = vmul.f32 %v278, %v518
        %v567 = vmul.f32 %v279, %v519
        %v568 = vmul.f32 %v280, %v520
        %v569 = vmul.f32 %v281, %v521
        %v570 = vmul.f32 %v282, %v522
        %v571 = vmul.f32 %v283, %v523
        %v572 = vmul.f32 %v284, %v524
        %v573 = vmul.f32 %v285, %v525
        %v574 = vmul.f32 %v286, %v526
        %v575 = vmul.f32 %v287, %v527
        %v576 = vmul.f32 %v288, %v528
        %v577 = vmul.f32 %v289, %v529
        %v578 = vmul.f32 %v290, %v530
        %v579 = vmul.f32 %v291, %v531
        %v580 = vmul.f32 %v292, %v532
        %v581 = vmul.f32 %v293, %v533
        %v582 = vmul.f32 %v294, %v534
        %v583 = vmul.f32 %v295, %v535
        %v584 = vmul.f32 %v296, %v536
        %v585 = vmul.f32 %v297, %v537
        %v586 = vmul.f32 %v298, %v538
        %v587 = vmul.f32 %v299, %v539
        %v588 = vmul.f32 %v300, %v540
        %v589 = vmul.f32 %v301, %v541
        %v590 = vmul.f32 %v302, %v542
        %v591 = vmul.f32 %v303, %v543
        %v592 = vmul.f32 %v304, %v544
        %v593 = vld [vmem:[#allocation2] sm:$0xff]
        %v594 = vld [vmem:[#allocation2 + $0x8] sm:$0xff]
        %595 = vmatprep.subr.mxu0 0.0
        %596 = vmatpush1.xpose.msra.mxu0 %v545
        %597 = vmatprep.subr.mxu0 0.0
        %598 = vmatpush1.xpose.msra.mxu0 %v546
        %599 = vmatprep.subr.mxu0 0.0
        %600 = vmatpush1.xpose.msra.mxu0 %v547
        %601 = vmatprep.subr.mxu0 0.0
        %602 = vmatpush1.xpose.msra.mxu0 %v548
        %603 = vmatprep.subr.mxu0 0.0
        %604 = vmatpush1.xpose.msra.mxu0 %v549
        %605 = vmatprep.subr.mxu0 0.0
        %606 = vmatpush1.xpose.msra.mxu0 %v550
        %607 = vmatprep.subr.mxu0 0.0
        %608 = vmatpush1.xpose.msra.mxu0 %v551
        %609 = vmatprep.subr.mxu0 0.0
        %610 = vmatpush1.xpose.msra.mxu0 %v552
        %611 = vmatprep.subr.mxu0 0.0
        %612 = vmatpush1.xpose.msra.mxu0 %v553
        %613 = vmatprep.subr.mxu0 0.0
        %614 = vmatpush1.xpose.msra.mxu0 %v554
        %615 = vmatprep.subr.mxu0 0.0
        %616 = vmatpush1.xpose.msra.mxu0 %v555
        %617 = vmatprep.subr.mxu0 0.0
        %618 = vmatpush1.xpose.msra.mxu0 %v556
        %619 = vmatprep.subr.mxu0 0.0
        %620 = vmatpush1.xpose.msra.mxu0 %v557
        %621 = vmatprep.subr.mxu0 0.0
        %622 = vmatpush1.xpose.msra.mxu0 %v558
        %623 = vmatprep.subr.mxu0 0.0
        %624 = vmatpush1.xpose.msra.mxu0 %v559
        %625 = vmatprep.subr.mxu0 0.0
        %626 = vmatpush1.xpose.msra.mxu0 %v560
        %627 = vmatprep.subr.mxu0 0.0
        %628 = vmatpush1.xpose.msra.mxu0 %v561
        %629 = vmatprep.subr.mxu0 0.0
        %630 = vmatpush1.xpose.msra.mxu0 %v562
        %631 = vmatprep.subr.mxu0 0.0
        %632 = vmatpush1.xpose.msra.mxu0 %v563
        %633 = vmatprep.subr.mxu0 0.0
        %634 = vmatpush1.xpose.msra.mxu0 %v564
        %635 = vmatprep.subr.mxu0 0.0
        %636 = vmatpush1.xpose.msra.mxu0 %v565
        %637 = vmatprep.subr.mxu0 0.0
        %638 = vmatpush1.xpose.msra.mxu0 %v566
        %639 = vmatprep.subr.mxu0 0.0
        %640 = vmatpush1.xpose.msra.mxu0 %v567
        %641 = vmatprep.subr.mxu0 0.0
        %642 = vmatpush1.xpose.msra.mxu0 %v568
        %643 = vmatprep.subr.mxu0 0.0
        %644 = vmatpush1.xpose.msra.mxu0 %v569
        %645 = vmatprep.subr.mxu0 0.0
        %646 = vmatpush1.xpose.msra.mxu0 %v570
        %647 = vmatprep.subr.mxu0 0.0
        %648 = vmatpush1.xpose.msra.mxu0 %v571
        %649 = vmatprep.subr.mxu0 0.0
        %650 = vmatpush1.xpose.msra.mxu0 %v572
        %651 = vmatprep.subr.mxu0 0.0
        %652 = vmatpush1.xpose.msra.mxu0 %v573
        %653 = vmatprep.subr.mxu0 0.0
        %654 = vmatpush1.xpose.msra.mxu0 %v574
        %655 = vmatprep.subr.mxu0 0.0
        %656 = vmatpush1.xpose.msra.mxu0 %v575
        %657 = vmatprep.subr.mxu0 0.0
        %658 = vmatpush1.xpose.msra.mxu0 %v576
        %659 = vmatprep.mubr.f32.mxu0 0.0
        %660 = vmatmul.mubr.f32.gmra.mrb[0].mxu0 %v593
        %v661 = vpop.f32.mrb[0].mxu0
        %v662 = vadd.f32 0.0, %v661
        %v663 = vpop.f32.mrb[0].mxu0
        %v664 = vadd.f32 0.0, %v663
        %665 = vmatprep.mubr.f32.mxu0 0.0
        %666 = vmatmul.mubr.f32.gmra.mrb[0].mxu0 %v594
        %v667 = vpop.f32.mrb[0].mxu0
        %v668 = vadd.f32 0.0, %v667
        %v669 = vpop.f32.mrb[0].mxu0
        %v670 = vadd.f32 0.0, %v669
        %671 = vdwg.mxu0
        %672 = vmatprep.subr.mxu0 0.0
        %673 = vmatpush1.xpose.msra.mxu0 %v577
        %674 = vmatprep.subr.mxu0 0.0
        %675 = vmatpush1.xpose.msra.mxu0 %v578
        %676 = vmatprep.subr.mxu0 0.0
        %677 = vmatpush1.xpose.msra.mxu0 %v579
        %678 = vmatprep.subr.mxu0 0.0
        %679 = vmatpush1.xpose.msra.mxu0 %v580
        %680 = vmatprep.subr.mxu0 0.0
        %681 = vmatpush1.xpose.msra.mxu0 %v581
        %682 = vmatprep.subr.mxu0 0.0
        %683 = vmatpush1.xpose.msra.mxu0 %v582
        %684 = vmatprep.subr.mxu0 0.0
        %685 = vmatpush1.xpose.msra.mxu0 %v583
        %686 = vmatprep.subr.mxu0 0.0
        %687 = vmatpush1.xpose.msra.mxu0 %v584
        %688 = vmatprep.subr.mxu0 0.0
        %689 = vmatpush1.xpose.msra.mxu0 %v585
        %690 = vmatprep.subr.mxu0 0.0
        %691 = vmatpush1.xpose.msra.mxu0 %v586
        %692 = vmatprep.subr.mxu0 0.0
        %693 = vmatpush1.xpose.msra.mxu0 %v587
        %694 = vmatprep.subr.mxu0 0.0
        %695 = vmatpush1.xpose.msra.mxu0 %v588
        %696 = vmatprep.subr.mxu0 0.0
        %697 = vmatpush1.xpose.msra.mxu0 %v589
        %698 = vmatprep.subr.mxu0 0.0
        %699 = vmatpush1.xpose.msra.mxu0 %v590
        %700 = vmatprep.subr.mxu0 0.0
        %701 = vmatpush1.xpose.msra.mxu0 %v591
        %702 = vmatprep.subr.mxu0 0.0
        %703 = vmatpush1.xpose.msra.mxu0 %v592
        %704 = vmatprep.subr.mxu0 0.0
        %705 = vmatpush1.xpose.msra.mxu0 0.0
        %706 = vmatprep.subr.mxu0 0.0
        %707 = vmatpush1.xpose.msra.mxu0 0.0
        %708 = vmatprep.subr.mxu0 0.0
        %709 = vmatpush1.xpose.msra.mxu0 0.0
        %710 = vmatprep.subr.mxu0 0.0
        %711 = vmatpush1.xpose.msra.mxu0 0.0
        %712 = vmatprep.subr.mxu0 0.0
        %713 = vmatpush1.xpose.msra.mxu0 0.0
        %714 = vmatprep.subr.mxu0 0.0
        %715 = vmatpush1.xpose.msra.mxu0 0.0
        %716 = vmatprep.subr.mxu0 0.0
        %717 = vmatpush1.xpose.msra.mxu0 0.0
        %718 = vmatprep.subr.mxu0 0.0
        %719 = vmatpush1.xpose.msra.mxu0 0.0
        %720 = vmatprep.subr.mxu0 0.0
        %721 = vmatpush1.xpose.msra.mxu0 0.0
        %722 = vmatprep.subr.mxu0 0.0
        %723 = vmatpush1.xpose.msra.mxu0 0.0
        %724 = vmatprep.subr.mxu0 0.0
        %725 = vmatpush1.xpose.msra.mxu0 0.0
        %726 = vmatprep.subr.mxu0 0.0
        %727 = vmatpush1.xpose.msra.mxu0 0.0
        %728 = vmatprep.subr.mxu0 0.0
        %729 = vmatpush1.xpose.msra.mxu0 0.0
        %730 = vmatprep.subr.mxu0 0.0
        %731 = vmatpush1.xpose.msra.mxu0 0.0
        %732 = vmatprep.subr.mxu0 0.0
        %733 = vmatpush1.xpose.msra.mxu0 0.0
        %734 = vmatprep.subr.mxu0 0.0
        %735 = vmatpush1.xpose.msra.mxu0 0.0
        %736 = vmatprep.mubr.f32.mxu0 0.0
        %737 = vmatmul.mubr.f32.gmra.mrb[0].mxu0 %v593
        %v738 = vpop.f32.mrb[0].mxu0
        %v739 = vadd.f32 0.0, %v738
        %v740 = vpop.f32.mrb[0].mxu0
        %741 = vmatprep.mubr.f32.mxu0 0.0
        %742 = vmatmul.mubr.f32.gmra.mrb[0].mxu0 %v594
        %v743 = vpop.f32.mrb[0].mxu0
        %v744 = vadd.f32 0.0, %v743
        %v745 = vpop.f32.mrb[0].mxu0
        %746 = vdwg.mxu0
        %v747 = vld [vmem:[%s224] sm:$0xff]
        %v748 = vld [vmem:[%s224 + $0x8] sm:$0xff]
        %v749 = vlaneseq
        %v750 = vand.u32 %v749, 127
        %v751 = vadd.s32 %v750, 128
        %v752 = vadd.s32 %v750, 256
        %s753 = smul.u32 %s20, 384
        %v754 = vstv %s753
        %v755 = vadd.s32 %v750, %v754
        %v756 = vadd.s32 %v751, %v754
        %v757 = vadd.s32 %v752, %v754
        %vm758 = vcmp.lt.s32.totalorder %v755, 300
        %vm759 = vcmp.lt.s32.totalorder %v756, 300
        %vm760 = vcmp.lt.s32.totalorder %v757, 300
        %761 = vset.pattern.permute.xlu0 0
        %762 = vperm.xlu0 %761, %v747
        %v763 = vpop.permute.xlu0 %762
        %764 = vset.pattern.permute.xlu0 0
        %765 = vperm.xlu0 %764, %v748
        %v766 = vpop.permute.xlu0 %765
        %vm767 = vcmp.ne.s32.totalorder %v755, %v763
        %vm768 = vcmp.ne.s32.totalorder %v756, %v763
        %vm769 = vcmp.ne.s32.totalorder %v757, %v763
        %vm770 = vcmp.ne.s32.totalorder %v755, %v766
        %vm771 = vcmp.ne.s32.totalorder %v756, %v766
        %vm772 = vcmp.ne.s32.totalorder %v757, %v766
        %vm773 = vmand %vm758, %vm767
        %vm774 = vmand %vm759, %vm768
        %vm775 = vmand %vm760, %vm769
        %vm776 = vmand %vm758, %vm770
        %vm777 = vmand %vm759, %vm771
        %vm778 = vmand %vm760, %vm772
        %v779 = vmul.f32 %v662, 64.0
        %v780 = vmul.f32 %v664, 64.0
        %v781 = vmul.f32 %v739, 64.0
        %v782 = vmul.f32 %v668, 64.0
        %v783 = vmul.f32 %v670, 64.0
        %v784 = vmul.f32 %v744, 64.0
        %v785 = vsel %vm773, %v779, -1e+30
        %v786 = vsel %vm774, %v780, -1e+30
        %v787 = vsel %vm775, %v781, -1e+30
        %v788 = vsel %vm776, %v782, -1e+30
        %v789 = vsel %vm777, %v783, -1e+30
        %v790 = vsel %vm778, %v784, -1e+30
        %v791 = vld [vmem:[#allocation3] sm:$0xff]
        %v792 = vld [vmem:[#allocation3 + $0x8] sm:$0xff]
        %v793 = vmax.f32 %v785, %v787
        %v794 = vmax.f32 %v793, %v786
        %795 = vmax.xlane.f32.xlu0 %v794
        %v796 = vpop.xlane.xlu0 %795
        %v797 = vmax.f32 %v788, %v790
        %v798 = vmax.f32 %v797, %v789
        %799 = vmax.xlane.f32.xlu0 %v798
        %v800 = vpop.xlane.xlu0 %799
        %v801 = vmax.f32 %v791, %v796
        %v802 = vmax.f32 %v792, %v800
        %v803 = vsub.f32 %v791, %v801
        %v804 = vsub.f32 %v792, %v802
        %v805 = vmul.f32 %v803, 1.442695
        %v806 = vpow.pop %v805
        %v807 = vmul.f32 %v804, 1.442695
        %v808 = vpow.pop %v807
        %v809 = vld [vmem:[#allocation4] sm:$0xff]
        %v810 = vld [vmem:[#allocation4 + $0x8] sm:$0xff]
        %v811 = vmul.f32 %v806, %v809
        %v812 = vmul.f32 %v808, %v810
        %814 = vset.pattern.permute.xlu0 0
        %815 = vperm.xlu0 %814, %v801
        %v816 = vpop.permute.xlu0 %815
        %819 = vset.pattern.permute.xlu0 0
        %820 = vperm.xlu0 %819, %v802
        %v821 = vpop.permute.xlu0 %820
        %v823 = vsub.f32 %v785, %v816
        %v824 = vsub.f32 %v786, %v816
        %v825 = vsub.f32 %v787, %v816
        %v826 = vsub.f32 %v788, %v821
        %v827 = vsub.f32 %v789, %v821
        %v828 = vsub.f32 %v790, %v821
        %v829 = vmul.f32 %v823, 1.442695
        %v830 = vpow.pop %v829
        %v831 = vmul.f32 %v824, 1.442695
        %v832 = vpow.pop %v831
        %v833 = vmul.f32 %v825, 1.442695
        %v834 = vpow.pop %v833
        %v835 = vmul.f32 %v826, 1.442695
        %v836 = vpow.pop %v835
        %v837 = vmul.f32 %v827, 1.442695
        %v838 = vpow.pop %v837
        %v839 = vmul.f32 %v828, 1.442695
        %v840 = vpow.pop %v839
        %v841 = vadd.f32 %v830, %v832
        %v842 = vadd.f32 %v841, %v834
        %843 = vadd.xlane.f32.xlu0 %v842
        %v844 = vpop.xlane.xlu0 %843
        %v845 = vadd.f32 %v836, %v838
        %v846 = vadd.f32 %v845, %v840
        %847 = vadd.xlane.f32.xlu0 %v846
        %v848 = vpop.xlane.xlu0 %847
        %v849 = vadd.f32 %v811, %v844
        %v850 = vadd.f32 %v812, %v848
        %vm851 = vcmask 7168
        %852 = vst.msk [vmem:[#allocation4] sm:$0xff] %vm851, %v849
        %853 = vst.msk [vmem:[#allocation4 + $0x8] sm:$0xff] %vm851, %v850
        %854 = vst.msk [vmem:[#allocation3] sm:$0xff] %vm851, %v801
        %855 = vst.msk [vmem:[#allocation3 + $0x8] sm:$0xff] %vm851, %v802
        // Predicated region
        $region41: #{tpu_custom_call.1} parent=31 // pred_check
          %p856 = pneg %p232
        $region42: #{tpu_custom_call.1} parent=31 // pred_check_branch
          %858 = sbr.rel (%p856) target = $region44
        $region43: #{tpu_custom_call.1} parent=31 // pred_region
          %v859 = vld [vmem:[#allocation3] sm:$0xff]
          %v860 = vld [vmem:[#allocation3 + $0x8] sm:$0xff]
          %v861 = vld [vmem:[#allocation4] sm:$0xff]
          %v862 = vld [vmem:[#allocation4 + $0x8] sm:$0xff]
          %v863 = vlog2.pop %v861
          %v864 = vmul.f32 %v863, 0.6931472
          %v865 = vlog2.pop %v862
          %v866 = vmul.f32 %v865, 0.6931472
          %v867 = vadd.f32 %v859, %v864
          %v868 = vadd.f32 %v860, %v866
          %869 = vst.msk [vmem:[%s230] sm:$0xff] %vm851, %v867
          %870 = vst.msk [vmem:[%s230 + $0x8] sm:$0xff] %vm851, %v868
        $region44: #{tpu_custom_call.1} parent=31 // pred_fallthru
          _
        %s871 = smul.u32 2, %s19
        %p872 = scmp.lt.s32.totalorder %s871, 3
        %s873 = scalar_select %p872, %s871, 3
        %s874 = smul.addr %s873, 8
        %s875 = scalar_lea.vmem %s3, %s874
        // Predicated region
        $region45: #{tpu_custom_call.1} parent=31 // pred_check
          %p876 = pneg %p123
        $region46: #{tpu_custom_call.1} parent=31 // pred_check_branch
          %878 = sbr.rel (%p876) target = $region48
        $region47: #{tpu_custom_call.1} parent=31 // pred_region
          %s879 = smul.u32 2, %s19
        $region48: #{tpu_custom_call.1} parent=31 // pred_fallthru
          _
      $region32: #{tpu_custom_call.1} parent=5 // pred_fallthru
        _
      %p880 = scmp.le.s32.totalorder 2, %s10
      // Predicated region
      $region49: #{tpu_custom_call.1} parent=5 // pred_check
        %p881 = pneg %p880
      $region50: #{tpu_custom_call.1} parent=5 // pred_check_branch
        %883 = sbr.rel (%p881) target = $region52
      $region51: #{tpu_custom_call.1} parent=5 // pred_region
        %s884 = ssub.s32 %s10, 2
        // Predicated region
        $region53: #{tpu_custom_call.1} parent=51 // pred_check
          %p885 = pneg %p129
        $region54: #{tpu_custom_call.1} parent=51 // pred_check_branch
          %887 = sbr.rel (%p885) target = $region56
        $region55: #{tpu_custom_call.1} parent=51 // pred_region
          %s888 = smul.u32 2, %s21
          %p889 = scmp.lt.s32.totalorder %s888, 3
          %s890 = scalar_select %p889, %s888, 3
          %s891 = smul.addr %s890, 8
          %s892 = scalar_lea.vmem %s3, %s891
        $region56: #{tpu_custom_call.1} parent=51 // pred_fallthru
          _
      $region52: #{tpu_custom_call.1} parent=5 // pred_fallthru
        _
    $region6: #{tpu_custom_call.1} parent=1 // loop_footer
      %s14 = sadd.s32 1, %s10
    $region7: #{tpu_custom_call.1} parent=1 // loop_footer_branch
      %9 = sbr.rel target = $region3
    $region8: #{tpu_custom_call.1} parent=1 // loop_exit
      _
    %893 = vsyncpa [#allocation6], 1
    %s894 = scalar_lea.sflag [#allocation6], 1
    %895 = vsyncpa %s894, 1

</llo_original>
